<compile_context>
chip_gen: v7x
topology: tpu7x:2x2x1
jax: 0.10.0
libtpu: 0.0.40
codegen_flags: <defaults>
</compile_context>

<pallas_src>
import jax
import jax.numpy as jnp
from jax.experimental import pallas as pl
from jax.experimental.pallas import tpu as pltpu

LANE = 128  # lane-pad every feature dim to one full vreg width


def _sigmoid_f32(h):
    # Single EUP transcendental per element (tanh); the mul/add ride the free
    # VALU slots.  Exact sigmoid identity: sigmoid(h) = 0.5*tanh(0.5*h) + 0.5.
    return 0.5 * jnp.tanh(0.5 * h) + 0.5


def _winenet_kernel(x_ref, w_ref, b_ref, o_ref):
    # x_ref: [TB, 128] bf16      (lane-padded input tile)
    # w_ref: [3, 128, 128] bf16  (w1, w2, w3 padded, stored [in, out]; VMEM-resident)
    # b_ref: [3, 1, 128] f32     (b1, b2, b3 padded; VMEM-resident)
    # o_ref: [TB, 128] f32       (lane-dense output slab -> unmasked vst)
    x = x_ref[...]

    h1 = jnp.dot(x, w_ref[0], preferred_element_type=jnp.float32) + b_ref[0]
    h1 = _sigmoid_f32(h1)

    h2 = jnp.dot(h1.astype(jnp.bfloat16), w_ref[1],
                 preferred_element_type=jnp.float32) + b_ref[1]
    h2 = _sigmoid_f32(h2)

    out = jnp.dot(h2.astype(jnp.bfloat16), w_ref[2],
                  preferred_element_type=jnp.float32) + b_ref[2]
    o_ref[...] = out.astype(o_ref.dtype)


def init_winenet_params(key, n_input, n_hidden, n_out=3):
    """PyTorch-like nn.Linear init: U(-1/sqrt(fan_in), +1/sqrt(fan_in)).
    Weights stored as [in_features, out_features] (transposed vs torch)."""
    keys = jax.random.split(key, 6)

    def linear(kw, kb, fan_in, fan_out):
        bound = 1.0 / jnp.sqrt(jnp.float32(fan_in))
        w = jax.random.uniform(kw, (fan_in, fan_out), jnp.float32, -bound, bound)
        b = jax.random.uniform(kb, (1, fan_out), jnp.float32, -bound, bound)
        return w, b

    w1, b1 = linear(keys[0], keys[1], n_input, n_hidden)
    w2, b2 = linear(keys[2], keys[3], n_hidden, n_hidden)
    w3, b3 = linear(keys[4], keys[5], n_hidden, n_out)
    return {"w1": w1, "b1": b1, "w2": w2, "b2": b2, "w3": w3, "b3": b3}


def pack_winenet_params(params, n_input, n_hidden, n_out=3):
    """Zero-pad every layer to [128,128]/[1,128] and pack into two slabs:
       weights -> bf16 [3,128,128], biases -> f32 [3,1,128]."""
    def pad_w(w):
        r, c = w.shape
        return jnp.zeros((LANE, LANE), jnp.float32).at[:r, :c].set(w)

    def pad_b(b):
        b = b.reshape(1, -1)
        return jnp.zeros((1, LANE), jnp.float32).at[:, :b.shape[1]].set(b)

    w_slab = jnp.stack([pad_w(params["w1"]),
                        pad_w(params["w2"]),
                        pad_w(params["w3"])]).astype(jnp.bfloat16)
    b_slab = jnp.stack([pad_b(params["b1"]),
                        pad_b(params["b2"]),
                        pad_b(params["b3"])])

    # Correctness invariant the kernel's zero-padding argument depends on:
    # rows >= n_hidden of w2/w3 (and rows >= n_input of w1) must be zero so
    # that padded sigmoid(0)=0.5 columns never leak into valid outputs.
    assert bool(jnp.all(w_slab[0, n_input:, :] == 0))
    assert bool(jnp.all(w_slab[1, n_hidden:, :] == 0))
    assert bool(jnp.all(w_slab[2, n_hidden:, :] == 0))
    return w_slab, b_slab


def winenet_forward(x, w_slab, b_slab, n_out=3, max_tile=512):
    """x: [B, n_input] f32. Returns [B, n_out] f32 logits."""
    B, F = x.shape

    # Batch tile: multiple of 16 (bf16 sublane packing).  Whole (padded) batch
    # for small B; cap at `max_tile` rows so (TB,128) bf16 in + (TB,128) f32
    # out double-buffered (+96 KB resident weights) fits comfortably inside
    # v5e's 16 MiB scoped VMEM and v7x's 64 MiB physical VMEM at any B.
    b16 = ((B + 15) // 16) * 16
    TB = min(max_tile, b16)
    Bp = ((b16 + TB - 1) // TB) * TB
    n_tiles = Bp // TB

    # Build the padded input directly in bf16 (no f32 intermediate slab).
    x_pad = (jnp.zeros((Bp, LANE), jnp.bfloat16)
             .at[:B, :F].set(x.astype(jnp.bfloat16)))

    bytes_accessed = (x_pad.size * 2 + w_slab.size * 2
                      + b_slab.size * 4 + Bp * LANE * 4)
    cost = pl.CostEstimate(flops=2 * 3 * Bp * LANE * LANE,
                           transcendentals=2 * Bp * LANE,  # one tanh per sigmoid elem
                           bytes_accessed=bytes_accessed)

    out_pad = pl.pallas_call(
        _winenet_kernel,
        out_shape=jax.ShapeDtypeStruct((Bp, LANE), jnp.float32),
        grid=(n_tiles,),
        in_specs=[
            # Streamed input tiles.
            pl.BlockSpec((TB, LANE), lambda i: (i, 0)),
            # Weight/bias slabs: same block every step -> stay VMEM-resident.
            pl.BlockSpec((3, LANE, LANE), lambda i: (0, 0, 0)),
            pl.BlockSpec((3, 1, LANE), lambda i: (0, 0, 0)),
        ],
        out_specs=pl.BlockSpec((TB, LANE), lambda i: (i, 0)),
        compiler_params=pltpu.CompilerParams(
            dimension_semantics=("parallel",)),  # both TCs on v7x; no-op v5e/v6e
        cost_estimate=cost,
    )(x_pad, w_slab, b_slab)

    # Slice valid rows/columns BEFORE any softmax so padding never leaks.
    return out_pad[:B, :n_out]


def winenet_forward_ref(x, p):
    """Pure-JAX f32 reference (matches the PyTorch module's forward)."""
    h1 = jax.nn.sigmoid(x @ p["w1"] + p["b1"])
    h2 = jax.nn.sigmoid(h1 @ p["w2"] + p["b2"])
    return h2 @ p["w3"] + p["b3"]


if __name__ == "__main__":
    n_input = 13
    n_hidden = 32
    n_out = 3
    batch = 8

    key = jax.random.PRNGKey(0)
    kx, kp = jax.random.split(key)
    x = jax.random.normal(kx, (batch, n_input), jnp.float32)
    params = init_winenet_params(kp, n_input, n_hidden, n_out)
    w_slab, b_slab = pack_winenet_params(params, n_input, n_hidden, n_out)

    out = winenet_forward(x, w_slab, b_slab, n_out)
    out = jax.block_until_ready(out)

    ref = winenet_forward_ref(x, params)
    assert out.shape == (batch, n_out), out.shape
    # bf16 matmul operands (f32 accumulation) -> loosened tolerance vs f32 ref.
    assert jnp.allclose(out, ref, atol=3e-2, rtol=3e-2), "mismatch vs JAX reference"

    # inference() path: softmax over dim=1 on the sliced (valid) logits only.
    probs = jax.nn.softmax(out, axis=1)
    jax.block_until_ready(probs)

    print("KERNEL_OK")
</pallas_src>

<mosaic_0001>
module attributes {stable_mosaic.version = 11 : i64} {
  func.func @_winenet_kernel(%arg0: i32, %arg1: memref<16x128xbf16, #tpu.memory_space<vmem>>, %arg2: memref<3x128x128xbf16, #tpu.memory_space<vmem>>, %arg3: memref<3x1x128xf32, #tpu.memory_space<vmem>>, %arg4: memref<16x128xf32, #tpu.memory_space<vmem>>) attributes {dimension_semantics = [#tpu.dimension_semantics<parallel>], iteration_bounds = array<i64: 1>, scalar_prefetch = 0 : i64, scratch_operands = 0 : i64, tpu.core_type = #tpu.core_type<tc>, window_params = [{transform_indices = @transform_0, window_bounds = array<i64: 16, 128>}, {pipeline_mode = #tpu.pipeline_mode<synchronous>, transform_indices = @transform_1, window_bounds = array<i64: 3, 128, 128>}, {pipeline_mode = #tpu.pipeline_mode<synchronous>, transform_indices = @transform_2, window_bounds = array<i64: 3, 1, 128>}, {transform_indices = @transform_3, window_bounds = array<i64: 16, 128>}]} {
    %c0 = arith.constant 0 : index
    %c0_0 = arith.constant 0 : index
    %0 = vector.load %arg1[%c0, %c0_0] : memref<16x128xbf16, #tpu.memory_space<vmem>>, vector<16x128xbf16>
    %c0_1 = arith.constant 0 : index
    %c0_2 = arith.constant 0 : index
    %c0_3 = arith.constant 0 : index
    %1 = vector.load %arg2[%c0_1, %c0_2, %c0_3] : memref<3x128x128xbf16, #tpu.memory_space<vmem>>, vector<1x128x128xbf16>
    %2 = vector.shape_cast %1 : vector<1x128x128xbf16> to vector<128x128xbf16>
    %cst = arith.constant dense<0.000000e+00> : vector<16x128xf32>
    %3 = tpu.matmul %0, %2, %cst {dimension_numbers = #tpu.dot_dimension_numbers<[1], [0], [0], [1], [0, 0, 1, 1], [], []>} : vector<16x128xbf16>, vector<128x128xbf16>, vector<16x128xf32> -> vector<16x128xf32>
    %c0_4 = arith.constant 0 : index
    %c0_5 = arith.constant 0 : index
    %c0_6 = arith.constant 0 : index
    %4 = vector.load %arg3[%c0_4, %c0_5, %c0_6] : memref<3x1x128xf32, #tpu.memory_space<vmem>>, vector<1x1x128xf32>
    %5 = vector.shape_cast %4 : vector<1x1x128xf32> to vector<1x128xf32>
    %6 = vector.broadcast %5 : vector<1x128xf32> to vector<16x128xf32>
    %7 = arith.addf %3, %6 : vector<16x128xf32>
    %cst_7 = arith.constant 5.000000e-01 : f32
    %8 = vector.broadcast %cst_7 : f32 to vector<16x128xf32>
    %9 = arith.mulf %8, %7 : vector<16x128xf32>
    %10 = math.tanh %9 : vector<16x128xf32>
    %cst_8 = arith.constant 5.000000e-01 : f32
    %11 = vector.broadcast %cst_8 : f32 to vector<16x128xf32>
    %12 = arith.mulf %11, %10 : vector<16x128xf32>
    %cst_9 = arith.constant 5.000000e-01 : f32
    %13 = vector.broadcast %cst_9 : f32 to vector<16x128xf32>
    %14 = arith.addf %12, %13 : vector<16x128xf32>
    %15 = arith.truncf %14 : vector<16x128xf32> to vector<16x128xbf16>
    %c1 = arith.constant 1 : index
    %c0_10 = arith.constant 0 : index
    %c0_11 = arith.constant 0 : index
    %16 = vector.load %arg2[%c1, %c0_10, %c0_11] : memref<3x128x128xbf16, #tpu.memory_space<vmem>>, vector<1x128x128xbf16>
    %17 = vector.shape_cast %16 : vector<1x128x128xbf16> to vector<128x128xbf16>
    %cst_12 = arith.constant dense<0.000000e+00> : vector<16x128xf32>
    %18 = tpu.matmul %15, %17, %cst_12 {dimension_numbers = #tpu.dot_dimension_numbers<[1], [0], [0], [1], [0, 0, 1, 1], [], []>} : vector<16x128xbf16>, vector<128x128xbf16>, vector<16x128xf32> -> vector<16x128xf32>
    %c1_13 = arith.constant 1 : index
    %c0_14 = arith.constant 0 : index
    %c0_15 = arith.constant 0 : index
    %19 = vector.load %arg3[%c1_13, %c0_14, %c0_15] : memref<3x1x128xf32, #tpu.memory_space<vmem>>, vector<1x1x128xf32>
    %20 = vector.shape_cast %19 : vector<1x1x128xf32> to vector<1x128xf32>
    %21 = vector.broadcast %20 : vector<1x128xf32> to vector<16x128xf32>
    %22 = arith.addf %18, %21 : vector<16x128xf32>
    %cst_16 = arith.constant 5.000000e-01 : f32
    %23 = vector.broadcast %cst_16 : f32 to vector<16x128xf32>
    %24 = arith.mulf %23, %22 : vector<16x128xf32>
    %25 = math.tanh %24 : vector<16x128xf32>
    %cst_17 = arith.constant 5.000000e-01 : f32
    %26 = vector.broadcast %cst_17 : f32 to vector<16x128xf32>
    %27 = arith.mulf %26, %25 : vector<16x128xf32>
    %cst_18 = arith.constant 5.000000e-01 : f32
    %28 = vector.broadcast %cst_18 : f32 to vector<16x128xf32>
    %29 = arith.addf %27, %28 : vector<16x128xf32>
    %30 = arith.truncf %29 : vector<16x128xf32> to vector<16x128xbf16>
    %c2 = arith.constant 2 : index
    %c0_19 = arith.constant 0 : index
    %c0_20 = arith.constant 0 : index
    %31 = vector.load %arg2[%c2, %c0_19, %c0_20] : memref<3x128x128xbf16, #tpu.memory_space<vmem>>, vector<1x128x128xbf16>
    %32 = vector.shape_cast %31 : vector<1x128x128xbf16> to vector<128x128xbf16>
    %cst_21 = arith.constant dense<0.000000e+00> : vector<16x128xf32>
    %33 = tpu.matmul %30, %32, %cst_21 {dimension_numbers = #tpu.dot_dimension_numbers<[1], [0], [0], [1], [0, 0, 1, 1], [], []>} : vector<16x128xbf16>, vector<128x128xbf16>, vector<16x128xf32> -> vector<16x128xf32>
    %c2_22 = arith.constant 2 : index
    %c0_23 = arith.constant 0 : index
    %c0_24 = arith.constant 0 : index
    %34 = vector.load %arg3[%c2_22, %c0_23, %c0_24] : memref<3x1x128xf32, #tpu.memory_space<vmem>>, vector<1x1x128xf32>
    %35 = vector.shape_cast %34 : vector<1x1x128xf32> to vector<1x128xf32>
    %36 = vector.broadcast %35 : vector<1x128xf32> to vector<16x128xf32>
    %37 = arith.addf %33, %36 : vector<16x128xf32>
    %c0_25 = arith.constant 0 : index
    %c0_26 = arith.constant 0 : index
    %38 = vector.load %arg4[%c0_25, %c0_26] : memref<16x128xf32, #tpu.memory_space<vmem>>, vector<16x128xf32>
    tpu.vector_store %arg4[%c0_25, %c0_26], %37 {strides = array<i32>} : memref<16x128xf32, #tpu.memory_space<vmem>>, vector<16x128xf32>,
    return
  }
  func.func @transform_0(%arg0: i32) -> (i32, i32) {
    %c0_i32 = arith.constant 0 : i32
    %c0_i32_0 = arith.constant 0 : i32
    return %arg0, %c0_i32 : i32, i32
  }
  func.func @transform_1(%arg0: i32) -> (i32, i32, i32) {
    %c0_i32 = arith.constant 0 : i32
    %c0_i32_0 = arith.constant 0 : i32
    %c0_i32_1 = arith.constant 0 : i32
    %c0_i32_2 = arith.constant 0 : i32
    return %c0_i32, %c0_i32_0, %c0_i32_1 : i32, i32, i32
  }
  func.func @transform_2(%arg0: i32) -> (i32, i32, i32) {
    %c0_i32 = arith.constant 0 : i32
    %c0_i32_0 = arith.constant 0 : i32
    %c0_i32_1 = arith.constant 0 : i32
    %c0_i32_2 = arith.constant 0 : i32
    return %c0_i32, %c0_i32_0, %c0_i32_1 : i32, i32, i32
  }
  func.func @transform_3(%arg0: i32) -> (i32, i32) {
    %c0_i32 = arith.constant 0 : i32
    %c0_i32_0 = arith.constant 0 : i32
    return %arg0, %c0_i32 : i32, i32
  }
}

</mosaic_0001>

<llo_original>
// kernel: tpu_custom_call.1
$region0: #{tpu_custom_call.1}
  #allocation0 [shape = 'u32[]', space=smem, size = 0x4, offset = 0x4, fixed_abs, tag = 'smem constant byte address 0x4 - core index']
  #allocation1 [shape = 'u32[144,128]{1,0:T(1,128)}', space=vmem, size = 0x12000, scoped, tag = 'internal scratch']
  %s0 = inlined_call_operand.hbm [shape: bf16[16,128], index: 0, kind: input, shape index: {}]
  %s1 = inlined_call_operand.hbm [shape: bf16[3,128,128], index: 1, kind: input, shape index: {}]
  %s2 = inlined_call_operand.vmem [shape: f32[3,1,128], index: 2, kind: input, shape index: {}]
  %s3 = inlined_call_operand.hbm [shape: f32[16,128], index: 3, kind: output, shape index: {}]
  %s4 = sld [smem:[#allocation0]]
  $region30: #{tpu_custom_call.1} parent=0
    _
  %s6 = ssub.s32 1, %s4
  %s7 = scalar_select 0, %s6, %s4
  $region1: #{tpu_custom_call.1} parent=0
    #allocation2 [shape = 'u8[4096]{0}', space=vmem, size = 0x1000, scoped, tag = 'input window, operand 0, single buffered']
    #allocation3 [shape = 's32[1]{0}', space=sflag, size = 0x4, scoped, tag = 'scoped memory for tpu_custom_call.1']
    #allocation4 [shape = 's32[1]{0}', space=sflag, size = 0x4, scoped, tag = 'scoped memory for tpu_custom_call.1']
    #allocation5 [shape = 'u8[98304]{0}', space=vmem, size = 0x18000, scoped, tag = 'input window, operand 1, single buffered']
    #allocation6 [shape = 's32[1]{0}', space=sflag, size = 0x4, scoped, tag = 'scoped memory for tpu_custom_call.1']
    #allocation7 [shape = 'u8[8192]{0}', space=vmem, size = 0x2000, scoped, tag = 'output window, operand 0, single buffered']
    %8 = vsyncpa [#allocation3], 0
    %9 = vsyncpa [#allocation6], 0
    %10 = vsyncpa [#allocation4], 0
    // Predicated region
    $region2: #{tpu_custom_call.1} parent=1 // pred_check
      _
    $region3: #{tpu_custom_call.1} parent=1 // pred_check_branch
      %12 = sbr.rel (0) target = $region5
    $region4: #{tpu_custom_call.1} parent=1 // pred_region
      %s14 = ssub.s32 128, 128
      %15 = vsyncadd [#allocation3], %s14
      %s16 = sshll.u32 [#allocation2], 4
      %s17 = int_to_ptr.vmem [resolvable:$true] %s16
      %22 = dma.hbm_to_vmem [thread:$0]  %s0, 128, %s17, [#allocation3], 64, 64, 4
    $region5: #{tpu_custom_call.1} parent=1 // pred_fallthru
      _
    // Predicated region
    $region6: #{tpu_custom_call.1} parent=1 // pred_check
      _
    $region7: #{tpu_custom_call.1} parent=1 // pred_check_branch
      %24 = sbr.rel (0) target = $region9
    $region8: #{tpu_custom_call.1} parent=1 // pred_region
      %s26 = ssub.s32 3072, 3072
      %27 = vsyncadd [#allocation6], %s26
      %s28 = sshll.u32 [#allocation5], 4
      %s29 = int_to_ptr.vmem [resolvable:$true] %s28
      %34 = dma.hbm_to_vmem [thread:$0]  %s1, 3072, %s29, [#allocation6], 64, 64, 4
    $region9: #{tpu_custom_call.1} parent=1 // pred_fallthru
      _
    // Predicated region
    $region10: #{tpu_custom_call.1} parent=1 // pred_check
      _
    $region11: #{tpu_custom_call.1} parent=1 // pred_check_branch
      %36 = sbr.rel (0) target = $region13
    $region12: #{tpu_custom_call.1} parent=1 // pred_region
      _
    $region13: #{tpu_custom_call.1} parent=1 // pred_fallthru
      _
    // Predicated region
    $region14: #{tpu_custom_call.1} parent=1 // pred_check
      _
    $region15: #{tpu_custom_call.1} parent=1 // pred_check_branch
      %38 = sbr.rel (0) target = $region17
    $region16: #{tpu_custom_call.1} parent=1 // pred_region
      %39 = dma.done [#allocation3], 128
    $region17: #{tpu_custom_call.1} parent=1 // pred_fallthru
      _
    // Predicated region
    $region18: #{tpu_custom_call.1} parent=1 // pred_check
      _
    $region19: #{tpu_custom_call.1} parent=1 // pred_check_branch
      %41 = sbr.rel (0) target = $region21
    $region20: #{tpu_custom_call.1} parent=1 // pred_region
      %42 = dma.done [#allocation6], 3072
    $region21: #{tpu_custom_call.1} parent=1 // pred_fallthru
      _
    %v44 = vld [vmem:[#allocation2] sm:$0xf]
    %v45 = vld [vmem:[#allocation2 + $0x4] sm:$0xf]
    %v46 = vld [vmem:[#allocation5] sm:$0xf]
    %v47 = vld [vmem:[#allocation5 + $0x4] sm:$0xf]
    %v48 = vld [vmem:[#allocation5 + $0x8] sm:$0xf]
    %v49 = vld [vmem:[#allocation5 + $0xc] sm:$0xf]
    %v50 = vld [vmem:[#allocation5 + $0x10] sm:$0xf]
    %v51 = vld [vmem:[#allocation5 + $0x14] sm:$0xf]
    %v52 = vld [vmem:[#allocation5 + $0x18] sm:$0xf]
    %v53 = vld [vmem:[#allocation5 + $0x1c] sm:$0xf]
    %v54 = vld [vmem:[#allocation5 + $0x20] sm:$0xf]
    %v55 = vld [vmem:[#allocation5 + $0x24] sm:$0xf]
    %v56 = vld [vmem:[#allocation5 + $0x28] sm:$0xf]
    %v57 = vld [vmem:[#allocation5 + $0x2c] sm:$0xf]
    %v58 = vld [vmem:[#allocation5 + $0x30] sm:$0xf]
    %v59 = vld [vmem:[#allocation5 + $0x34] sm:$0xf]
    %v60 = vld [vmem:[#allocation5 + $0x38] sm:$0xf]
    %v61 = vld [vmem:[#allocation5 + $0x3c] sm:$0xf]
    %v62 = vld [vmem:[%s2] sm:$0x1]
    %v64 = vlaneseq
    %v65 = vshrl.u32 %v64, 7
    %v66 = vsub.s32 0, %v65
    %v67 = vrot.slane %v62, %v66
    %v71 = vunpack.c.l.b16 %v44
    %v72 = vunpack.c.l.b16 %v45
    %v73 = vpack.c.b16 %v72, %v71
    %v91 = vunpack.c.l.b16 %v46
    %v92 = vunpack.c.l.b16 %v47
    %v93 = vunpack.c.l.b16 %v48
    %v94 = vunpack.c.l.b16 %v49
    %v95 = vunpack.c.l.b16 %v50
    %v96 = vunpack.c.l.b16 %v51
    %v97 = vunpack.c.l.b16 %v52
    %v98 = vunpack.c.l.b16 %v53
    %v99 = vunpack.c.l.b16 %v54
    %v100 = vunpack.c.l.b16 %v55
    %v101 = vunpack.c.l.b16 %v56
    %v102 = vunpack.c.l.b16 %v57
    %v103 = vunpack.c.l.b16 %v58
    %v104 = vunpack.c.l.b16 %v59
    %v105 = vunpack.c.l.b16 %v60
    %v106 = vunpack.c.l.b16 %v61
    %v107 = vpack.c.b16 %v92, %v91
    %v108 = vpack.c.b16 %v94, %v93
    %v109 = vpack.c.b16 %v96, %v95
    %v110 = vpack.c.b16 %v98, %v97
    %v111 = vpack.c.b16 %v100, %v99
    %v112 = vpack.c.b16 %v102, %v101
    %v113 = vpack.c.b16 %v104, %v103
    %v114 = vpack.c.b16 %v106, %v105
    %123 = vmatprep.subr.bf16.mxu0 0
    %124 = vmatpush1.bf16.msra.mxu0 %v107
    %125 = vmatprep.subr.bf16.mxu0 0
    %126 = vmatpush1.bf16.msra.mxu0 %v108
    %127 = vmatprep.subr.bf16.mxu0 0
    %128 = vmatpush1.bf16.msra.mxu0 %v109
    %129 = vmatprep.subr.bf16.mxu0 0
    %130 = vmatpush1.bf16.msra.mxu0 %v110
    %131 = vmatprep.subr.bf16.mxu0 0
    %132 = vmatpush1.bf16.msra.mxu0 %v111
    %133 = vmatprep.subr.bf16.mxu0 0
    %134 = vmatpush1.bf16.msra.mxu0 %v112
    %135 = vmatprep.subr.bf16.mxu0 0
    %136 = vmatpush1.bf16.msra.mxu0 %v113
    %137 = vmatprep.subr.bf16.mxu0 0
    %138 = vmatpush1.bf16.msra.mxu0 %v114
    %139 = vmatprep.subr.bf16.mxu0 0
    %140 = vmatpush1.bf16.msra.mxu0 0
    %141 = vmatprep.subr.bf16.mxu0 0
    %142 = vmatpush1.bf16.msra.mxu0 0
    %143 = vmatprep.subr.bf16.mxu0 0
    %144 = vmatpush1.bf16.msra.mxu0 0
    %145 = vmatprep.subr.bf16.mxu0 0
    %146 = vmatpush1.bf16.msra.mxu0 0
    %147 = vmatprep.subr.bf16.mxu0 0
    %148 = vmatpush1.bf16.msra.mxu0 0
    %149 = vmatprep.subr.bf16.mxu0 0
    %150 = vmatpush1.bf16.msra.mxu0 0
    %151 = vmatprep.subr.bf16.mxu0 0
    %152 = vmatpush1.bf16.msra.mxu0 0
    %153 = vmatprep.subr.bf16.mxu0 0
    %154 = vmatpush1.bf16.msra.mxu0 0
    %155 = vmatprep.mubr.bf16.mxu0 0
    %156 = vmatmul.mubr.bf16.gmra.mrb[0].mxu0 %v73
    %v157 = vpop.f32.mrb[0].mxu0
    %v158 = vadd.f32 %v67, %v157
    %v159 = vpop.f32.mrb[0].mxu0
    %v160 = vpop.f32.mrb[0].mxu0
    %v161 = vadd.f32 %v67, %v160
    %v162 = vpop.f32.mrb[0].mxu0
    %163 = vdwg.mxu0
    %v164 = vmul.f32 %v158, 0.5
    %v165 = vmul.f32 %v161, 0.5
    %v166 = vtanh.pop %v164
    %v167 = vtanh.pop %v165
    %v168 = vmul.f32 %v166, 0.5
    %v169 = vmul.f32 %v167, 0.5
    %v170 = vadd.f32 %v168, 0.5
    %v171 = vadd.f32 %v169, 0.5
    %v172 = vpack.c.bf16 %v171, %v170
    %s173 = scalar_lea.vmem [#allocation5], 64
    %v174 = vld [vmem:[%s173] sm:$0xf]
    %v175 = vld [vmem:[%s173 + $0x4] sm:$0xf]
    %v176 = vld [vmem:[%s173 + $0x8] sm:$0xf]
    %v177 = vld [vmem:[%s173 + $0xc] sm:$0xf]
    %v178 = vld [vmem:[%s173 + $0x10] sm:$0xf]
    %v179 = vld [vmem:[%s173 + $0x14] sm:$0xf]
    %v180 = vld [vmem:[%s173 + $0x18] sm:$0xf]
    %v181 = vld [vmem:[%s173 + $0x1c] sm:$0xf]
    %v182 = vld [vmem:[%s173 + $0x20] sm:$0xf]
    %v183 = vld [vmem:[%s173 + $0x24] sm:$0xf]
    %v184 = vld [vmem:[%s173 + $0x28] sm:$0xf]
    %v185 = vld [vmem:[%s173 + $0x2c] sm:$0xf]
    %v186 = vld [vmem:[%s173 + $0x30] sm:$0xf]
    %v187 = vld [vmem:[%s173 + $0x34] sm:$0xf]
    %v188 = vld [vmem:[%s173 + $0x38] sm:$0xf]
    %v189 = vld [vmem:[%s173 + $0x3c] sm:$0xf]
    %s190 = scalar_lea.vmem %s2, 1
    %v191 = vld [vmem:[%s190] sm:$0x1]
    %v193 = vlaneseq
    %v194 = vshrl.u32 %v193, 7
    %v195 = vsub.s32 0, %v194
    %v196 = vrot.slane %v191, %v195
    %v214 = vunpack.c.l.b16 %v174
    %v215 = vunpack.c.l.b16 %v175
    %v216 = vunpack.c.l.b16 %v176
    %v217 = vunpack.c.l.b16 %v177
    %v218 = vunpack.c.l.b16 %v178
    %v219 = vunpack.c.l.b16 %v179
    %v220 = vunpack.c.l.b16 %v180
    %v221 = vunpack.c.l.b16 %v181
    %v222 = vunpack.c.l.b16 %v182
    %v223 = vunpack.c.l.b16 %v183
    %v224 = vunpack.c.l.b16 %v184
    %v225 = vunpack.c.l.b16 %v185
    %v226 = vunpack.c.l.b16 %v186
    %v227 = vunpack.c.l.b16 %v187
    %v228 = vunpack.c.l.b16 %v188
    %v229 = vunpack.c.l.b16 %v189
    %v230 = vpack.c.b16 %v215, %v214
    %v231 = vpack.c.b16 %v217, %v216
    %v232 = vpack.c.b16 %v219, %v218
    %v233 = vpack.c.b16 %v221, %v220
    %v234 = vpack.c.b16 %v223, %v222
    %v235 = vpack.c.b16 %v225, %v224
    %v236 = vpack.c.b16 %v227, %v226
    %v237 = vpack.c.b16 %v229, %v228
    %246 = vmatprep.subr.bf16.mxu0 0
    %247 = vmatpush1.bf16.msra.mxu0 %v230
    %248 = vmatprep.subr.bf16.mxu0 0
    %249 = vmatpush1.bf16.msra.mxu0 %v231
    %250 = vmatprep.subr.bf16.mxu0 0
    %251 = vmatpush1.bf16.msra.mxu0 %v232
    %252 = vmatprep.subr.bf16.mxu0 0
    %253 = vmatpush1.bf16.msra.mxu0 %v233
    %254 = vmatprep.subr.bf16.mxu0 0
    %255 = vmatpush1.bf16.msra.mxu0 %v234
    %256 = vmatprep.subr.bf16.mxu0 0
    %257 = vmatpush1.bf16.msra.mxu0 %v235
    %258 = vmatprep.subr.bf16.mxu0 0
    %259 = vmatpush1.bf16.msra.mxu0 %v236
    %260 = vmatprep.subr.bf16.mxu0 0
    %261 = vmatpush1.bf16.msra.mxu0 %v237
    %262 = vmatprep.subr.bf16.mxu0 0
    %263 = vmatpush1.bf16.msra.mxu0 0
    %264 = vmatprep.subr.bf16.mxu0 0
    %265 = vmatpush1.bf16.msra.mxu0 0
    %266 = vmatprep.subr.bf16.mxu0 0
    %267 = vmatpush1.bf16.msra.mxu0 0
    %268 = vmatprep.subr.bf16.mxu0 0
    %269 = vmatpush1.bf16.msra.mxu0 0
    %270 = vmatprep.subr.bf16.mxu0 0
    %271 = vmatpush1.bf16.msra.mxu0 0
    %272 = vmatprep.subr.bf16.mxu0 0
    %273 = vmatpush1.bf16.msra.mxu0 0
    %274 = vmatprep.subr.bf16.mxu0 0
    %275 = vmatpush1.bf16.msra.mxu0 0
    %276 = vmatprep.subr.bf16.mxu0 0
    %277 = vmatpush1.bf16.msra.mxu0 0
    %278 = vmatprep.mubr.bf16.mxu0 0
    %279 = vmatmul.mubr.bf16.gmra.mrb[0].mxu0 %v172
    %v280 = vpop.f32.mrb[0].mxu0
    %v281 = vadd.f32 %v196, %v280
    %v282 = vpop.f32.mrb[0].mxu0
    %v283 = vpop.f32.mrb[0].mxu0
    %v284 = vadd.f32 %v196, %v283
    %v285 = vpop.f32.mrb[0].mxu0
    %286 = vdwg.mxu0
    %v287 = vmul.f32 %v281, 0.5
    %v288 = vmul.f32 %v284, 0.5
    %v289 = vtanh.pop %v287
    %v290 = vtanh.pop %v288
    %v291 = vmul.f32 %v289, 0.5
    %v292 = vmul.f32 %v290, 0.5
    %v293 = vadd.f32 %v291, 0.5
    %v294 = vadd.f32 %v292, 0.5
    %v295 = vpack.c.bf16 %v294, %v293
    %s296 = scalar_lea.vmem [#allocation5], 128
    %v297 = vld [vmem:[%s296] sm:$0xf]
    %v298 = vld [vmem:[%s296 + $0x4] sm:$0xf]
    %v299 = vld [vmem:[%s296 + $0x8] sm:$0xf]
    %v300 = vld [vmem:[%s296 + $0xc] sm:$0xf]
    %v301 = vld [vmem:[%s296 + $0x10] sm:$0xf]
    %v302 = vld [vmem:[%s296 + $0x14] sm:$0xf]
    %v303 = vld [vmem:[%s296 + $0x18] sm:$0xf]
    %v304 = vld [vmem:[%s296 + $0x1c] sm:$0xf]
    %v305 = vld [vmem:[%s296 + $0x20] sm:$0xf]
    %v306 = vld [vmem:[%s296 + $0x24] sm:$0xf]
    %v307 = vld [vmem:[%s296 + $0x28] sm:$0xf]
    %v308 = vld [vmem:[%s296 + $0x2c] sm:$0xf]
    %v309 = vld [vmem:[%s296 + $0x30] sm:$0xf]
    %v310 = vld [vmem:[%s296 + $0x34] sm:$0xf]
    %v311 = vld [vmem:[%s296 + $0x38] sm:$0xf]
    %v312 = vld [vmem:[%s296 + $0x3c] sm:$0xf]
    %s313 = scalar_lea.vmem %s2, 2
    %v314 = vld [vmem:[%s313] sm:$0x1]
    %v316 = vlaneseq
    %v317 = vshrl.u32 %v316, 7
    %v318 = vsub.s32 0, %v317
    %v319 = vrot.slane %v314, %v318
    %v337 = vunpack.c.l.b16 %v297
    %v338 = vunpack.c.l.b16 %v298
    %v339 = vunpack.c.l.b16 %v299
    %v340 = vunpack.c.l.b16 %v300
    %v341 = vunpack.c.l.b16 %v301
    %v342 = vunpack.c.l.b16 %v302
    %v343 = vunpack.c.l.b16 %v303
    %v344 = vunpack.c.l.b16 %v304
    %v345 = vunpack.c.l.b16 %v305
    %v346 = vunpack.c.l.b16 %v306
    %v347 = vunpack.c.l.b16 %v307
    %v348 = vunpack.c.l.b16 %v308
    %v349 = vunpack.c.l.b16 %v309
    %v350 = vunpack.c.l.b16 %v310
    %v351 = vunpack.c.l.b16 %v311
    %v352 = vunpack.c.l.b16 %v312
    %v353 = vpack.c.b16 %v338, %v337
    %v354 = vpack.c.b16 %v340, %v339
    %v355 = vpack.c.b16 %v342, %v341
    %v356 = vpack.c.b16 %v344, %v343
    %v357 = vpack.c.b16 %v346, %v345
    %v358 = vpack.c.b16 %v348, %v347
    %v359 = vpack.c.b16 %v350, %v349
    %v360 = vpack.c.b16 %v352, %v351
    %369 = vmatprep.subr.bf16.mxu0 0
    %370 = vmatpush1.bf16.msra.mxu0 %v353
    %371 = vmatprep.subr.bf16.mxu0 0
    %372 = vmatpush1.bf16.msra.mxu0 %v354
    %373 = vmatprep.subr.bf16.mxu0 0
    %374 = vmatpush1.bf16.msra.mxu0 %v355
    %375 = vmatprep.subr.bf16.mxu0 0
    %376 = vmatpush1.bf16.msra.mxu0 %v356
    %377 = vmatprep.subr.bf16.mxu0 0
    %378 = vmatpush1.bf16.msra.mxu0 %v357
    %379 = vmatprep.subr.bf16.mxu0 0
    %380 = vmatpush1.bf16.msra.mxu0 %v358
    %381 = vmatprep.subr.bf16.mxu0 0
    %382 = vmatpush1.bf16.msra.mxu0 %v359
    %383 = vmatprep.subr.bf16.mxu0 0
    %384 = vmatpush1.bf16.msra.mxu0 %v360
    %385 = vmatprep.subr.bf16.mxu0 0
    %386 = vmatpush1.bf16.msra.mxu0 0
    %387 = vmatprep.subr.bf16.mxu0 0
    %388 = vmatpush1.bf16.msra.mxu0 0
    %389 = vmatprep.subr.bf16.mxu0 0
    %390 = vmatpush1.bf16.msra.mxu0 0
    %391 = vmatprep.subr.bf16.mxu0 0
    %392 = vmatpush1.bf16.msra.mxu0 0
    %393 = vmatprep.subr.bf16.mxu0 0
    %394 = vmatpush1.bf16.msra.mxu0 0
    %395 = vmatprep.subr.bf16.mxu0 0
    %396 = vmatpush1.bf16.msra.mxu0 0
    %397 = vmatprep.subr.bf16.mxu0 0
    %398 = vmatpush1.bf16.msra.mxu0 0
    %399 = vmatprep.subr.bf16.mxu0 0
    %400 = vmatpush1.bf16.msra.mxu0 0
    %401 = vmatprep.mubr.bf16.mxu0 0
    %402 = vmatmul.mubr.bf16.gmra.mrb[0].mxu0 %v295
    %v403 = vpop.f32.mrb[0].mxu0
    %v404 = vadd.f32 %v319, %v403
    %v405 = vpop.f32.mrb[0].mxu0
    %v406 = vpop.f32.mrb[0].mxu0
    %v407 = vadd.f32 %v319, %v406
    %v408 = vpop.f32.mrb[0].mxu0
    %409 = vdwg.mxu0
    %410 = vst [vmem:[#allocation7] sm:$0xff] %v404
    %411 = vst [vmem:[#allocation7 + $0x8] sm:$0xff] %v407
    // Predicated region
    $region22: #{tpu_custom_call.1} parent=1 // pred_check
      _
    $region23: #{tpu_custom_call.1} parent=1 // pred_check_branch
      %413 = sbr.rel (0) target = $region25
    $region24: #{tpu_custom_call.1} parent=1 // pred_region
      %s415 = ssub.s32 256, 256
      %416 = vsyncadd [#allocation4], %s415
      %s417 = sshll.u32 [#allocation7], 4
      %s418 = int_to_ptr.vmem [resolvable:$true] %s417
      %423 = dma.vmem_to_hbm [thread:$0]  %s418, 256, %s3, [#allocation4], 128, 128, 8
    $region25: #{tpu_custom_call.1} parent=1 // pred_fallthru
      _
    // Predicated region
    $region26: #{tpu_custom_call.1} parent=1 // pred_check
      _
    $region27: #{tpu_custom_call.1} parent=1 // pred_check_branch
      %425 = sbr.rel (0) target = $region29
    $region28: #{tpu_custom_call.1} parent=1 // pred_region
      %426 = dma.done [#allocation4], 256
    $region29: #{tpu_custom_call.1} parent=1 // pred_fallthru
      _
    %427 = vsyncpa [#allocation3], 1
    %428 = vsyncpa [#allocation6], 1
    %429 = vsyncpa [#allocation4], 1

</llo_original>
